<compile_context>
chip_gen: v7x
topology: tpu7x:2x2x1
jax: 0.10.0
libtpu: 0.0.40
codegen_flags: <defaults>
</compile_context>

<pallas_src>
import jax
import jax.numpy as jnp
from jax.experimental import pallas as pl
from jax.experimental.pallas import tpu as pltpu

KH = KW = 5
PAD = 2
BN_EPS = 1e-5
KPAD = 128       # lane-aligned reduction dim (KH*KW*Cin = 100 -> 128)
COUT_PAD = 128   # lane-aligned output / matmul-N dim (Cout = 3 -> 128)
TM = 128         # rows of the patch matrix per grid step


def _kernel(patch_ref, w_ref, p_ref, o_ref):
    # patch_ref : (TM, KPAD)        lane-dense im2col rows, K..KPAD cols are zero
    # w_ref     : (KPAD, COUT_PAD)  BN-scale-folded conv weight, zero-padded on both dims
    # p_ref     : (2, COUT_PAD)     row 0 = folded (conv+BN) bias, row 1 = PReLU alpha
    # o_ref     : (TM, COUT_PAD)    lane-dense output tile (real channels sliced in wrapper)
    acc = jnp.dot(patch_ref[...], w_ref[...],
                  preferred_element_type=jnp.float32)     # (TM, COUT_PAD) on the MXU
    bias = p_ref[0:1, :]                                   # (1, COUT_PAD)
    alpha = p_ref[1:2, :]                                  # (1, COUT_PAD)
    y = acc + bias
    o_ref[...] = jnp.where(y > 0.0, y, alpha * y).astype(o_ref.dtype)


def output_transition_pallas(x_nchw, w_oihw, conv_b, gamma, beta,
                             running_mean, running_var, prelu_alpha):
    """Forward pass of OutputTransition. x_nchw: (N, Cin, H, W) float32."""
    N, Cin, H, W = x_nchw.shape
    Cout = w_oihw.shape[0]
    K = KH * KW * Cin
    assert K <= KPAD, "KH*KW*Cin must fit the lane-padded reduction dim"
    assert Cout <= COUT_PAD
    M = N * H * W
    M_pad = ((M + TM - 1) // TM) * TM

    # ---- wrapper-side lane-dense im2col (layout plumbing only; compute stays in kernel) --
    # feature order of a patch row is (dy, dx, c), matching w_hwio.reshape(K, Cout) below.
    x_nhwc = jnp.transpose(x_nchw, (0, 2, 3, 1))                       # (N, H, W, Cin)
    xpad = jnp.pad(x_nhwc, ((0, 0), (PAD, PAD), (PAD, PAD), (0, 0)))   # (N, H+4, W+4, Cin)
    taps = [xpad[:, dy:dy + H, dx:dx + W, :]
            for dy in range(KH) for dx in range(KW)]
    patches = jnp.concatenate(taps, axis=-1).reshape(M, K)             # (M, K)
    patches = jnp.pad(patches.astype(jnp.float32),
                      ((0, M_pad - M), (0, KPAD - K)))                 # (M_pad, KPAD)

    # ---- parameter-side glue: fold eval-mode BN into weight + bias, pad to lane width ----
    scale = gamma / jnp.sqrt(running_var + BN_EPS)                     # (Cout,)
    w_hwio = jnp.transpose(w_oihw, (2, 3, 1, 0)) * scale               # (KH, KW, Cin, Cout)
    w_mat = jnp.pad(w_hwio.reshape(K, Cout).astype(jnp.float32),
                    ((0, KPAD - K), (0, COUT_PAD - Cout)))             # (KPAD, COUT_PAD)
    bias = (conv_b - running_mean) * scale + beta                      # (Cout,)
    params = jnp.pad(jnp.stack([bias, prelu_alpha.astype(jnp.float32)]),
                     ((0, 0), (0, COUT_PAD - Cout)))                   # (2, COUT_PAD)

    out2d = pl.pallas_call(
        _kernel,
        out_shape=jax.ShapeDtypeStruct((M_pad, COUT_PAD), jnp.float32),
        grid_spec=pltpu.PrefetchScalarGridSpec(
            num_scalar_prefetch=0,
            grid=(M_pad // TM,),
            in_specs=[
                pl.BlockSpec((TM, KPAD), lambda i: (i, 0)),
                pl.BlockSpec((KPAD, COUT_PAD), lambda i: (0, 0)),   # block idx constant ->
                pl.BlockSpec((2, COUT_PAD), lambda i: (0, 0)),      #   stays resident, no re-DMA
            ],
            out_specs=pl.BlockSpec((TM, COUT_PAD), lambda i: (i, 0)),
        ),
        compiler_params=pltpu.CompilerParams(
            dimension_semantics=("parallel",)),                      # megacore-shardable on v7x
    )(patches, w_mat, params)

    # Rows are in (n, h, w) order, so slicing the real channels and a row-major reshape
    # equals permute(0, 2, 3, 1).contiguous().view(N, -1).
    return out2d[:M, :Cout].reshape(N, H * W * Cout)


def output_transition_ref(x_nchw, w_oihw, conv_b, gamma, beta,
                          running_mean, running_var, prelu_alpha):
    """Pure-JAX reference (mirrors the PyTorch forward, eval-mode BN)."""
    conv = jax.lax.conv_general_dilated(
        x_nchw, w_oihw, window_strides=(1, 1),
        padding=((PAD, PAD), (PAD, PAD)),
        dimension_numbers=("NCHW", "OIHW", "NCHW"))
    conv = conv + conv_b[None, :, None, None]
    bn = (gamma[None, :, None, None]
          * (conv - running_mean[None, :, None, None])
          / jnp.sqrt(running_var[None, :, None, None] + BN_EPS)
          + beta[None, :, None, None])
    y = jnp.where(bn > 0, bn, prelu_alpha[None, :, None, None] * bn)
    y = jnp.transpose(y, (0, 2, 3, 1))
    return y.reshape(x_nchw.shape[0], -1)


if __name__ == "__main__":
    # Small shapes consistent with the module: batch=2, ch_in=4, n_classes=3, 16x16 spatial.
    N, Cin, Cout, H, W = 2, 4, 3, 16, 16

    key = jax.random.PRNGKey(0)
    k_x, k_w, k_b, k_g, k_beta, k_m, k_v, k_a = jax.random.split(key, 8)

    x = jax.random.normal(k_x, (N, Cin, H, W), dtype=jnp.float32)

    # Deterministic synthetic parameters (shapes from the module's __init__).
    w = jax.random.normal(k_w, (Cout, Cin, KH, KW), dtype=jnp.float32) * 0.1
    conv_b = jax.random.normal(k_b, (Cout,), dtype=jnp.float32) * 0.1
    gamma = 1.0 + 0.1 * jax.random.normal(k_g, (Cout,), dtype=jnp.float32)
    beta = 0.1 * jax.random.normal(k_beta, (Cout,), dtype=jnp.float32)
    running_mean = 0.1 * jax.random.normal(k_m, (Cout,), dtype=jnp.float32)
    running_var = jnp.abs(1.0 + 0.1 * jax.random.normal(k_v, (Cout,), dtype=jnp.float32))
    prelu_alpha = jnp.full((Cout,), 0.25, dtype=jnp.float32)  # PReLU(n_classes) default init

    fwd = jax.jit(output_transition_pallas)
    out = fwd(x, w, conv_b, gamma, beta, running_mean, running_var, prelu_alpha)
    out = jax.block_until_ready(out)

    ref = output_transition_ref(x, w, conv_b, gamma, beta,
                                running_mean, running_var, prelu_alpha)
    assert out.shape == (N, H * W * Cout), out.shape
    assert jnp.allclose(out, ref, rtol=1e-4, atol=1e-4), float(jnp.max(jnp.abs(out - ref)))

    print("KERNEL_OK")
</pallas_src>

<mosaic_0001>
module attributes {stable_mosaic.version = 11 : i64} {
  func.func @_kernel(%arg0: i32, %arg1: memref<128x128xf32, #tpu.memory_space<vmem>>, %arg2: memref<128x128xf32, #tpu.memory_space<vmem>>, %arg3: memref<2x128xf32, #tpu.memory_space<vmem>>, %arg4: memref<128x128xf32, #tpu.memory_space<vmem>>) attributes {dimension_semantics = [#tpu.dimension_semantics<parallel>], iteration_bounds = array<i64: 4>, scalar_prefetch = 0 : i64, scratch_operands = 0 : i64, tpu.core_type = #tpu.core_type<tc>, window_params = [{transform_indices = @transform_0, window_bounds = array<i64: 128, 128>}, {pipeline_mode = #tpu.pipeline_mode<synchronous>, transform_indices = @transform_1, window_bounds = array<i64: 128, 128>}, {pipeline_mode = #tpu.pipeline_mode<synchronous>, transform_indices = @transform_2, window_bounds = array<i64: 2, 128>}, {transform_indices = @transform_3, window_bounds = array<i64: 128, 128>}]} {
    %c0 = arith.constant 0 : index
    %c0_0 = arith.constant 0 : index
    %0 = vector.load %arg1[%c0, %c0_0] : memref<128x128xf32, #tpu.memory_space<vmem>>, vector<128x128xf32>
    %c0_1 = arith.constant 0 : index
    %c0_2 = arith.constant 0 : index
    %1 = vector.load %arg2[%c0_1, %c0_2] : memref<128x128xf32, #tpu.memory_space<vmem>>, vector<128x128xf32>
    %cst = arith.constant dense<0.000000e+00> : vector<128x128xf32>
    %2 = tpu.matmul %0, %1, %cst {dimension_numbers = #tpu.dot_dimension_numbers<[1], [0], [0], [1], [0, 0, 1, 1], [], []>} : vector<128x128xf32>, vector<128x128xf32>, vector<128x128xf32> -> vector<128x128xf32>
    %c0_3 = arith.constant 0 : index
    %c0_4 = arith.constant 0 : index
    %3 = vector.load %arg3[%c0_3, %c0_4] : memref<2x128xf32, #tpu.memory_space<vmem>>, vector<1x128xf32>
    %c1 = arith.constant 1 : index
    %c0_5 = arith.constant 0 : index
    %4 = vector.load %arg3[%c1, %c0_5] : memref<2x128xf32, #tpu.memory_space<vmem>>, vector<1x128xf32>
    %5 = vector.broadcast %3 : vector<1x128xf32> to vector<128x128xf32>
    %6 = arith.addf %2, %5 : vector<128x128xf32>
    %cst_6 = arith.constant 0.000000e+00 : f32
    %7 = vector.broadcast %cst_6 : f32 to vector<128x128xf32>
    %8 = arith.cmpf ogt, %6, %7 : vector<128x128xf32>
    %9 = vector.broadcast %4 : vector<1x128xf32> to vector<128x128xf32>
    %10 = arith.mulf %9, %6 : vector<128x128xf32>
    %11 = arith.select %8, %6, %10 : vector<128x128xi1>, vector<128x128xf32>
    %c0_7 = arith.constant 0 : index
    %c0_8 = arith.constant 0 : index
    %12 = vector.load %arg4[%c0_7, %c0_8] : memref<128x128xf32, #tpu.memory_space<vmem>>, vector<128x128xf32>
    tpu.vector_store %arg4[%c0_7, %c0_8], %11 {strides = array<i32>} : memref<128x128xf32, #tpu.memory_space<vmem>>, vector<128x128xf32>,
    return
  }
  func.func @transform_0(%arg0: i32) -> (i32, i32) {
    %c0_i32 = arith.constant 0 : i32
    %c0_i32_0 = arith.constant 0 : i32
    return %arg0, %c0_i32 : i32, i32
  }
  func.func @transform_1(%arg0: i32) -> (i32, i32) {
    %c0_i32 = arith.constant 0 : i32
    %c0_i32_0 = arith.constant 0 : i32
    %c0_i32_1 = arith.constant 0 : i32
    return %c0_i32, %c0_i32_0 : i32, i32
  }
  func.func @transform_2(%arg0: i32) -> (i32, i32) {
    %c0_i32 = arith.constant 0 : i32
    %c0_i32_0 = arith.constant 0 : i32
    %c0_i32_1 = arith.constant 0 : i32
    return %c0_i32, %c0_i32_0 : i32, i32
  }
  func.func @transform_3(%arg0: i32) -> (i32, i32) {
    %c0_i32 = arith.constant 0 : i32
    %c0_i32_0 = arith.constant 0 : i32
    return %arg0, %c0_i32 : i32, i32
  }
}

</mosaic_0001>

<llo_original>
// kernel: output_transition_pallas.1
$region0: #{output_transition_pallas.1}
  #allocation0 [shape = 'u32[]', space=smem, size = 0x4, offset = 0x4, fixed_abs, tag = 'smem constant byte address 0x4 - core index']
  #allocation1 [shape = 'u32[144,128]{1,0:T(1,128)}', space=vmem, size = 0x12000, scoped, tag = 'internal scratch']
  %s0 = inlined_call_operand.vmem [shape: f32[512,128], index: 0, kind: input, shape index: {}]
  %s1 = inlined_call_operand.vmem [shape: f32[128,128], index: 1, kind: input, shape index: {}]
  %s2 = inlined_call_operand.vmem [shape: f32[2,128], index: 2, kind: input, shape index: {}]
  %s3 = inlined_call_operand.vmem [shape: f32[512,128], index: 3, kind: output, shape index: {}]
  %s4 = sld [smem:[#allocation0]]
  $region45: #{output_transition_pallas.1} parent=0
    _
  %s6 = ssub.s32 1, %s4
  %s7 = scalar_select 0, %s6, %s4
  loop: start=0, step=1, limit=6
  $region2: #{output_transition_pallas.1} parent=0 // loop_pre_header
    _
  $region3: #{output_transition_pallas.1} parent=0 // loop_header
    %s9 = sphi 0, %s13
    %p10 = scmp.ge.s32.totalorder %s9, 6
    %s19 = sphi 0, %s21
    %s22 = sphi 0, %s19
    %s23 = sphi 0, %s22
    %s39 = sphi 0, %s23
    %s43 = sphi 0, %s43
    %s45 = sphi 0, %s43
    %s46 = sphi 0, %s45
    %s60 = sphi 0, %s46
    %s64 = sphi 0, %s64
    %s66 = sphi 0, %s64
    %s67 = sphi 0, %s66
    %s81 = sphi 0, %s67
    %s87 = sphi 0, %s89
    %s90 = sphi 0, %s87
    %s91 = sphi 0, %s90
    %s107 = sphi 0, %s91
  $region4: #{output_transition_pallas.1} parent=0 // loop_header_branch
    %12 = sbr.rel (%p10) target = $region8
  $region5: #{output_transition_pallas.1} parent=0 // loop_body
    %s14 = ssub.s32 %s9, 1
    %s15 = ssub.s32 %s9, 2
    %s16 = sadd.s32 %s9, 1
    %s17 = ssub.s32 %s9, %s16
    %p18 = scmp.eq.s32.totalorder %s17, 0
    %s20 = sadd.s32 %s19, 1
    %s21 = scalar_select %p18, %s19, %s20
    %p24 = pneg %p18
    %p25 = scmp.eq.s32.totalorder %s9, 3
    %p26 = por %p24, %p25
    %p27 = scmp.ne.s32.totalorder %s19, %s22
    %p28 = scmp.eq.s32.totalorder %s9, 0
    %p29 = por %p27, %p28
    %p30 = scmp.ne.s32.totalorder %s19, %s22
    %p31 = scmp.eq.s32.totalorder %s14, 3
    %p32 = por %p30, %p31
    %p33 = scmp.ne.s32.totalorder %s22, %s23
    %p34 = scmp.eq.s32.totalorder %s14, 0
    %p35 = por %p33, %p34
    %p36 = scmp.ne.s32.totalorder %s22, %s23
    %p37 = scmp.eq.s32.totalorder %s15, 3
    %p38 = por %p36, %p37
    %p40 = scmp.ne.s32.totalorder %s23, %s39
    %p41 = scmp.eq.s32.totalorder %s15, 0
    %p42 = por %p40, %p41
    %s44 = sadd.s32 %s43, 1
    %p47 = scmp.eq.s32.totalorder %s9, 3
    %p48 = scmp.ne.s32.totalorder %s43, %s45
    %p49 = scmp.eq.s32.totalorder %s9, 0
    %p50 = por %p48, %p49
    %p51 = scmp.ne.s32.totalorder %s43, %s45
    %p52 = scmp.eq.s32.totalorder %s14, 3
    %p53 = por %p51, %p52
    %p54 = scmp.ne.s32.totalorder %s45, %s46
    %p55 = scmp.eq.s32.totalorder %s14, 0
    %p56 = por %p54, %p55
    %p57 = scmp.ne.s32.totalorder %s45, %s46
    %p58 = scmp.eq.s32.totalorder %s15, 3
    %p59 = por %p57, %p58
    %p61 = scmp.ne.s32.totalorder %s46, %s60
    %p62 = scmp.eq.s32.totalorder %s15, 0
    %p63 = por %p61, %p62
    %s65 = sadd.s32 %s64, 1
    %p68 = scmp.eq.s32.totalorder %s9, 3
    %p69 = scmp.ne.s32.totalorder %s64, %s66
    %p70 = scmp.eq.s32.totalorder %s9, 0
    %p71 = por %p69, %p70
    %p72 = scmp.ne.s32.totalorder %s64, %s66
    %p73 = scmp.eq.s32.totalorder %s14, 3
    %p74 = por %p72, %p73
    %p75 = scmp.ne.s32.totalorder %s66, %s67
    %p76 = scmp.eq.s32.totalorder %s14, 0
    %p77 = por %p75, %p76
    %p78 = scmp.ne.s32.totalorder %s66, %s67
    %p79 = scmp.eq.s32.totalorder %s15, 3
    %p80 = por %p78, %p79
    %p82 = scmp.ne.s32.totalorder %s67, %s81
    %p83 = scmp.eq.s32.totalorder %s15, 0
    %p84 = por %p82, %p83
    %s85 = ssub.s32 %s9, %s16
    %p86 = scmp.eq.s32.totalorder %s85, 0
    %s88 = sadd.s32 %s87, 1
    %s89 = scalar_select %p86, %s87, %s88
    %p92 = pneg %p86
    %p93 = scmp.eq.s32.totalorder %s9, 3
    %p94 = por %p92, %p93
    %p95 = scmp.ne.s32.totalorder %s87, %s90
    %p96 = scmp.eq.s32.totalorder %s9, 0
    %p97 = por %p95, %p96
    %p98 = scmp.ne.s32.totalorder %s87, %s90
    %p99 = scmp.eq.s32.totalorder %s14, 3
    %p100 = por %p98, %p99
    %p101 = scmp.ne.s32.totalorder %s90, %s91
    %p102 = scmp.eq.s32.totalorder %s14, 0
    %p103 = por %p101, %p102
    %p104 = scmp.ne.s32.totalorder %s90, %s91
    %p105 = scmp.eq.s32.totalorder %s15, 3
    %p106 = por %p104, %p105
    %p108 = scmp.ne.s32.totalorder %s91, %s107
    %p109 = scmp.eq.s32.totalorder %s15, 0
    %p110 = por %p108, %p109
    %p111 = scmp.le.s32.totalorder 1, %s9
    %p112 = scmp.lt.s32.totalorder %s9, 5
    %p113 = pnand %p111, %p112
    %p114 = pneg %p113
    // Predicated region
    $region9: #{output_transition_pallas.1} parent=5 // pred_check
      _
    $region10: #{output_transition_pallas.1} parent=5 // pred_check_branch
      %116 = sbr.rel (%p113) target = $region12
    $region11: #{output_transition_pallas.1} parent=5 // pred_region
      %s117 = ssub.s32 %s9, 1
      // Predicated region
      $region13: #{output_transition_pallas.1} parent=11 // pred_check
        %p118 = pneg %p56
      $region14: #{output_transition_pallas.1} parent=11 // pred_check_branch
        %120 = sbr.rel (%p118) target = $region16
      $region15: #{output_transition_pallas.1} parent=11 // pred_region
        _
      $region16: #{output_transition_pallas.1} parent=11 // pred_fallthru
        _
      // Predicated region
      $region17: #{output_transition_pallas.1} parent=11 // pred_check
        %p121 = pneg %p77
      $region18: #{output_transition_pallas.1} parent=11 // pred_check_branch
        %123 = sbr.rel (%p121) target = $region20
      $region19: #{output_transition_pallas.1} parent=11 // pred_region
        _
      $region20: #{output_transition_pallas.1} parent=11 // pred_fallthru
        _
    $region12: #{output_transition_pallas.1} parent=5 // pred_fallthru
      _
    %p124 = scmp.lt.s32.totalorder %s9, 4
    // Predicated region
    $region21: #{output_transition_pallas.1} parent=5 // pred_check
      %p125 = pneg %p124
    $region22: #{output_transition_pallas.1} parent=5 // pred_check_branch
      %127 = sbr.rel (%p125) target = $region24
    $region23: #{output_transition_pallas.1} parent=5 // pred_region
      // Predicated region
      $region25: #{output_transition_pallas.1} parent=23 // pred_check
        %p128 = pneg %p29
      $region26: #{output_transition_pallas.1} parent=23 // pred_check_branch
        %130 = sbr.rel (%p128) target = $region28
      $region27: #{output_transition_pallas.1} parent=23 // pred_region
        %s131 = smul.u32 16, %s9
        %p132 = scmp.lt.s32.totalorder %s131, 63
        %s133 = scalar_select %p132, %s131, 63
        %s134 = smul.addr %s133, 8
        %s135 = scalar_lea.vmem %s0, %s134
        %s136 = smul.u32 16, %s9
      $region28: #{output_transition_pallas.1} parent=23 // pred_fallthru
        _
    $region24: #{output_transition_pallas.1} parent=5 // pred_fallthru
      _
    %p137 = scmp.le.s32.totalorder 1, %s9
    %p138 = scmp.lt.s32.totalorder %s9, 5
    %p139 = pnand %p137, %p138
    %p140 = pneg %p139
    // Predicated region
    $region29: #{output_transition_pallas.1} parent=5 // pred_check
      _
    $region30: #{output_transition_pallas.1} parent=5 // pred_check_branch
      %142 = sbr.rel (%p139) target = $region32
    $region31: #{output_transition_pallas.1} parent=5 // pred_region
      %s143 = ssub.s32 %s9, 1
      %s144 = smul.u32 16, %s14
      %p145 = scmp.lt.s32.totalorder %s144, 63
      %s146 = scalar_select %p145, %s144, 63
      %s147 = smul.addr %s146, 8
      %s148 = scalar_lea.vmem %s0, %s147
      %p149 = pneg %p35
      %p150 = pneg %p32
      %p151 = pneg %p56
      %p152 = pneg %p53
      %p153 = pneg %p77
      %p154 = pneg %p74
      %p155 = pneg %p103
      %p156 = pneg %p100
      %s157 = smul.u32 16, %s14
      %p158 = scmp.lt.s32.totalorder %s157, 63
      %s159 = scalar_select %p158, %s157, 63
      %s160 = smul.addr %s159, 8
      %s161 = scalar_lea.vmem %s3, %s160
      %s162 = smul.u32 16, %s14
      %p163 = scmp.lt.s32.totalorder %s162, 63
      %s164 = scalar_select %p163, %s162, 63
      %s165 = smul.addr %s164, 8
      %s166 = scalar_lea.vmem %s0, %s165
      %s167 = smul.u32 16, %s14
      %s168 = smul.u32 16, %s14
      %p169 = scmp.lt.s32.totalorder %s168, 63
      %s170 = scalar_select %p169, %s168, 63
      %s171 = smul.addr %s170, 8
      %s172 = scalar_lea.vmem %s3, %s171
      %s173 = smul.u32 16, %s14
      %v174 = vld [vmem:[%s166] sm:$0xff]
      %v175 = vld [vmem:[%s166 + $0x8] sm:$0xff]
      %v176 = vld [vmem:[%s166 + $0x10] sm:$0xff]
      %v177 = vld [vmem:[%s166 + $0x18] sm:$0xff]
      %v178 = vld [vmem:[%s166 + $0x20] sm:$0xff]
      %v179 = vld [vmem:[%s166 + $0x28] sm:$0xff]
      %v180 = vld [vmem:[%s166 + $0x30] sm:$0xff]
      %v181 = vld [vmem:[%s166 + $0x38] sm:$0xff]
      %v182 = vld [vmem:[%s166 + $0x40] sm:$0xff]
      %v183 = vld [vmem:[%s166 + $0x48] sm:$0xff]
      %v184 = vld [vmem:[%s166 + $0x50] sm:$0xff]
      %v185 = vld [vmem:[%s166 + $0x58] sm:$0xff]
      %v186 = vld [vmem:[%s166 + $0x60] sm:$0xff]
      %v187 = vld [vmem:[%s166 + $0x68] sm:$0xff]
      %v188 = vld [vmem:[%s166 + $0x70] sm:$0xff]
      %v189 = vld [vmem:[%s166 + $0x78] sm:$0xff]
      %v190 = vld [vmem:[%s1] sm:$0xff]
      %v191 = vld [vmem:[%s1 + $0x8] sm:$0xff]
      %v192 = vld [vmem:[%s1 + $0x10] sm:$0xff]
      %v193 = vld [vmem:[%s1 + $0x18] sm:$0xff]
      %v194 = vld [vmem:[%s1 + $0x20] sm:$0xff]
      %v195 = vld [vmem:[%s1 + $0x28] sm:$0xff]
      %v196 = vld [vmem:[%s1 + $0x30] sm:$0xff]
      %v197 = vld [vmem:[%s1 + $0x38] sm:$0xff]
      %v198 = vld [vmem:[%s1 + $0x40] sm:$0xff]
      %v199 = vld [vmem:[%s1 + $0x48] sm:$0xff]
      %v200 = vld [vmem:[%s1 + $0x50] sm:$0xff]
      %v201 = vld [vmem:[%s1 + $0x58] sm:$0xff]
      %v202 = vld [vmem:[%s1 + $0x60] sm:$0xff]
      %v203 = vld [vmem:[%s1 + $0x68] sm:$0xff]
      %v204 = vld [vmem:[%s1 + $0x70] sm:$0xff]
      %v205 = vld [vmem:[%s1 + $0x78] sm:$0xff]
      %v206 = vld [vmem:[%s2] sm:$0x1]
      %v207 = vld [vmem:[%s2 + $0x1] sm:$0x1]
      %v208 = vlaneseq
      %v209 = vshrl.u32 %v208, 7
      %v210 = vsub.s32 0, %v209
      %v211 = vrot.slane %v206, %v210
      %212 = vmatprep.subr.mxu0 0.0
      %213 = vmatpush1.msra.mxu0 %v190
      %214 = vmatprep.subr.mxu0 0.0
      %215 = vmatpush1.msra.mxu0 %v191
      %216 = vmatprep.subr.mxu0 0.0
      %217 = vmatpush1.msra.mxu0 %v192
      %218 = vmatprep.subr.mxu0 0.0
      %219 = vmatpush1.msra.mxu0 %v193
      %220 = vmatprep.subr.mxu0 0.0
      %221 = vmatpush1.msra.mxu0 %v194
      %222 = vmatprep.subr.mxu0 0.0
      %223 = vmatpush1.msra.mxu0 %v195
      %224 = vmatprep.subr.mxu0 0.0
      %225 = vmatpush1.msra.mxu0 %v196
      %226 = vmatprep.subr.mxu0 0.0
      %227 = vmatpush1.msra.mxu0 %v197
      %228 = vmatprep.subr.mxu0 0.0
      %229 = vmatpush1.msra.mxu0 %v198
      %230 = vmatprep.subr.mxu0 0.0
      %231 = vmatpush1.msra.mxu0 %v199
      %232 = vmatprep.subr.mxu0 0.0
      %233 = vmatpush1.msra.mxu0 %v200
      %234 = vmatprep.subr.mxu0 0.0
      %235 = vmatpush1.msra.mxu0 %v201
      %236 = vmatprep.subr.mxu0 0.0
      %237 = vmatpush1.msra.mxu0 %v202
      %238 = vmatprep.subr.mxu0 0.0
      %239 = vmatpush1.msra.mxu0 %v203
      %240 = vmatprep.subr.mxu0 0.0
      %241 = vmatpush1.msra.mxu0 %v204
      %242 = vmatprep.subr.mxu0 0.0
      %243 = vmatpush1.msra.mxu0 %v205
      %244 = vmatprep.subr.mxu0 0.0
      %245 = vmatpush1.msra.mxu0 0.0
      %246 = vmatprep.subr.mxu0 0.0
      %247 = vmatpush1.msra.mxu0 0.0
      %248 = vmatprep.subr.mxu0 0.0
      %249 = vmatpush1.msra.mxu0 0.0
      %250 = vmatprep.subr.mxu0 0.0
      %251 = vmatpush1.msra.mxu0 0.0
      %252 = vmatprep.subr.mxu0 0.0
      %253 = vmatpush1.msra.mxu0 0.0
      %254 = vmatprep.subr.mxu0 0.0
      %255 = vmatpush1.msra.mxu0 0.0
      %256 = vmatprep.subr.mxu0 0.0
      %257 = vmatpush1.msra.mxu0 0.0
      %258 = vmatprep.subr.mxu0 0.0
      %259 = vmatpush1.msra.mxu0 0.0
      %260 = vmatprep.subr.mxu0 0.0
      %261 = vmatpush1.msra.mxu0 0.0
      %262 = vmatprep.subr.mxu0 0.0
      %263 = vmatpush1.msra.mxu0 0.0
      %264 = vmatprep.subr.mxu0 0.0
      %265 = vmatpush1.msra.mxu0 0.0
      %266 = vmatprep.subr.mxu0 0.0
      %267 = vmatpush1.msra.mxu0 0.0
      %268 = vmatprep.subr.mxu0 0.0
      %269 = vmatpush1.msra.mxu0 0.0
      %270 = vmatprep.subr.mxu0 0.0
      %271 = vmatpush1.msra.mxu0 0.0
      %272 = vmatprep.subr.mxu0 0.0
      %273 = vmatpush1.msra.mxu0 0.0
      %274 = vmatprep.subr.mxu0 0.0
      %275 = vmatpush1.msra.mxu0 0.0
      %276 = vmatprep.mubr.f32.mxu0 0.0
      %277 = vmatmul.mubr.f32.gmra.mrb[0].mxu0 %v174
      %v278 = vpop.f32.mrb[0].mxu0
      %v279 = vadd.f32 %v211, %v278
      %v280 = vpop.f32.mrb[0].mxu0
      %281 = vmatprep.mubr.f32.mxu0 0.0
      %282 = vmatmul.mubr.f32.gmra.mrb[0].mxu0 %v175
      %v283 = vpop.f32.mrb[0].mxu0
      %v284 = vadd.f32 %v211, %v283
      %v285 = vpop.f32.mrb[0].mxu0
      %286 = vmatprep.mubr.f32.mxu0 0.0
      %287 = vmatmul.mubr.f32.gmra.mrb[0].mxu0 %v176
      %v288 = vpop.f32.mrb[0].mxu0
      %v289 = vadd.f32 %v211, %v288
      %v290 = vpop.f32.mrb[0].mxu0
      %291 = vmatprep.mubr.f32.mxu0 0.0
      %292 = vmatmul.mubr.f32.gmra.mrb[0].mxu0 %v177
      %v293 = vpop.f32.mrb[0].mxu0
      %v294 = vadd.f32 %v211, %v293
      %v295 = vpop.f32.mrb[0].mxu0
      %296 = vmatprep.mubr.f32.mxu0 0.0
      %297 = vmatmul.mubr.f32.gmra.mrb[0].mxu0 %v178
      %v298 = vpop.f32.mrb[0].mxu0
      %v299 = vadd.f32 %v211, %v298
      %v300 = vpop.f32.mrb[0].mxu0
      %301 = vmatprep.mubr.f32.mxu0 0.0
      %302 = vmatmul.mubr.f32.gmra.mrb[0].mxu0 %v179
      %v303 = vpop.f32.mrb[0].mxu0
      %v304 = vadd.f32 %v211, %v303
      %v305 = vpop.f32.mrb[0].mxu0
      %306 = vmatprep.mubr.f32.mxu0 0.0
      %307 = vmatmul.mubr.f32.gmra.mrb[0].mxu0 %v180
      %v308 = vpop.f32.mrb[0].mxu0
      %v309 = vadd.f32 %v211, %v308
      %v310 = vpop.f32.mrb[0].mxu0
      %311 = vmatprep.mubr.f32.mxu0 0.0
      %312 = vmatmul.mubr.f32.gmra.mrb[0].mxu0 %v181
      %v313 = vpop.f32.mrb[0].mxu0
      %v314 = vadd.f32 %v211, %v313
      %v315 = vpop.f32.mrb[0].mxu0
      %316 = vmatprep.mubr.f32.mxu0 0.0
      %317 = vmatmul.mubr.f32.gmra.mrb[0].mxu0 %v182
      %v318 = vpop.f32.mrb[0].mxu0
      %v319 = vadd.f32 %v211, %v318
      %v320 = vpop.f32.mrb[0].mxu0
      %321 = vmatprep.mubr.f32.mxu0 0.0
      %322 = vmatmul.mubr.f32.gmra.mrb[0].mxu0 %v183
      %v323 = vpop.f32.mrb[0].mxu0
      %v324 = vadd.f32 %v211, %v323
      %v325 = vpop.f32.mrb[0].mxu0
      %326 = vmatprep.mubr.f32.mxu0 0.0
      %327 = vmatmul.mubr.f32.gmra.mrb[0].mxu0 %v184
      %v328 = vpop.f32.mrb[0].mxu0
      %v329 = vadd.f32 %v211, %v328
      %v330 = vpop.f32.mrb[0].mxu0
      %331 = vmatprep.mubr.f32.mxu0 0.0
      %332 = vmatmul.mubr.f32.gmra.mrb[0].mxu0 %v185
      %v333 = vpop.f32.mrb[0].mxu0
      %v334 = vadd.f32 %v211, %v333
      %v335 = vpop.f32.mrb[0].mxu0
      %336 = vmatprep.mubr.f32.mxu0 0.0
      %337 = vmatmul.mubr.f32.gmra.mrb[0].mxu0 %v186
      %v338 = vpop.f32.mrb[0].mxu0
      %v339 = vadd.f32 %v211, %v338
      %v340 = vpop.f32.mrb[0].mxu0
      %341 = vmatprep.mubr.f32.mxu0 0.0
      %342 = vmatmul.mubr.f32.gmra.mrb[0].mxu0 %v187
      %v343 = vpop.f32.mrb[0].mxu0
      %v344 = vadd.f32 %v211, %v343
      %v345 = vpop.f32.mrb[0].mxu0
      %346 = vmatprep.mubr.f32.mxu0 0.0
      %347 = vmatmul.mubr.f32.gmra.mrb[0].mxu0 %v188
      %v348 = vpop.f32.mrb[0].mxu0
      %v349 = vadd.f32 %v211, %v348
      %v350 = vpop.f32.mrb[0].mxu0
      %351 = vmatprep.mubr.f32.mxu0 0.0
      %352 = vmatmul.mubr.f32.gmra.mrb[0].mxu0 %v189
      %v353 = vpop.f32.mrb[0].mxu0
      %v354 = vadd.f32 %v211, %v353
      %v355 = vpop.f32.mrb[0].mxu0
      %356 = vdwg.mxu0
      %vm357 = vcmp.gt.f32.partialorder %v279, 0.0
      %vm358 = vcmp.gt.f32.partialorder %v284, 0.0
      %vm359 = vcmp.gt.f32.partialorder %v289, 0.0
      %vm360 = vcmp.gt.f32.partialorder %v294, 0.0
      %vm361 = vcmp.gt.f32.partialorder %v299, 0.0
      %vm362 = vcmp.gt.f32.partialorder %v304, 0.0
      %vm363 = vcmp.gt.f32.partialorder %v309, 0.0
      %vm364 = vcmp.gt.f32.partialorder %v314, 0.0
      %vm365 = vcmp.gt.f32.partialorder %v319, 0.0
      %vm366 = vcmp.gt.f32.partialorder %v324, 0.0
      %vm367 = vcmp.gt.f32.partialorder %v329, 0.0
      %vm368 = vcmp.gt.f32.partialorder %v334, 0.0
      %vm369 = vcmp.gt.f32.partialorder %v339, 0.0
      %vm370 = vcmp.gt.f32.partialorder %v344, 0.0
      %vm371 = vcmp.gt.f32.partialorder %v349, 0.0
      %vm372 = vcmp.gt.f32.partialorder %v354, 0.0
      %v373 = vlaneseq
      %v374 = vshrl.u32 %v373, 7
      %v375 = vsub.s32 0, %v374
      %v376 = vrot.slane %v207, %v375
      %v377 = vmul.f32 %v376, %v279
      %v378 = vmul.f32 %v376, %v284
      %v379 = vmul.f32 %v376, %v289
      %v380 = vmul.f32 %v376, %v294
      %v381 = vmul.f32 %v376, %v299
      %v382 = vmul.f32 %v376, %v304
      %v383 = vmul.f32 %v376, %v309
      %v384 = vmul.f32 %v376, %v314
      %v385 = vmul.f32 %v376, %v319
      %v386 = vmul.f32 %v376, %v324
      %v387 = vmul.f32 %v376, %v329
      %v388 = vmul.f32 %v376, %v334
      %v389 = vmul.f32 %v376, %v339
      %v390 = vmul.f32 %v376, %v344
      %v391 = vmul.f32 %v376, %v349
      %v392 = vmul.f32 %v376, %v354
      %v393 = vsel %vm357, %v279, %v377
      %v394 = vsel %vm358, %v284, %v378
      %v395 = vsel %vm359, %v289, %v379
      %v396 = vsel %vm360, %v294, %v380
      %v397 = vsel %vm361, %v299, %v381
      %v398 = vsel %vm362, %v304, %v382
      %v399 = vsel %vm363, %v309, %v383
      %v400 = vsel %vm364, %v314, %v384
      %v401 = vsel %vm365, %v319, %v385
      %v402 = vsel %vm366, %v324, %v386
      %v403 = vsel %vm367, %v329, %v387
      %v404 = vsel %vm368, %v334, %v388
      %v405 = vsel %vm369, %v339, %v389
      %v406 = vsel %vm370, %v344, %v390
      %v407 = vsel %vm371, %v349, %v391
      %v408 = vsel %vm372, %v354, %v392
      %409 = vst [vmem:[%s172] sm:$0xff] %v393
      %410 = vst [vmem:[%s172 + $0x8] sm:$0xff] %v394
      %411 = vst [vmem:[%s172 + $0x10] sm:$0xff] %v395
      %412 = vst [vmem:[%s172 + $0x18] sm:$0xff] %v396
      %413 = vst [vmem:[%s172 + $0x20] sm:$0xff] %v397
      %414 = vst [vmem:[%s172 + $0x28] sm:$0xff] %v398
      %415 = vst [vmem:[%s172 + $0x30] sm:$0xff] %v399
      %416 = vst [vmem:[%s172 + $0x38] sm:$0xff] %v400
      %417 = vst [vmem:[%s172 + $0x40] sm:$0xff] %v401
      %418 = vst [vmem:[%s172 + $0x48] sm:$0xff] %v402
      %419 = vst [vmem:[%s172 + $0x50] sm:$0xff] %v403
      %420 = vst [vmem:[%s172 + $0x58] sm:$0xff] %v404
      %421 = vst [vmem:[%s172 + $0x60] sm:$0xff] %v405
      %422 = vst [vmem:[%s172 + $0x68] sm:$0xff] %v406
      %423 = vst [vmem:[%s172 + $0x70] sm:$0xff] %v407
      %424 = vst [vmem:[%s172 + $0x78] sm:$0xff] %v408
      %s425 = smul.u32 16, %s14
      %p426 = scmp.lt.s32.totalorder %s425, 63
      %s427 = scalar_select %p426, %s425, 63
      %s428 = smul.addr %s427, 8
      %s429 = scalar_lea.vmem %s3, %s428
      // Predicated region
      $region33: #{output_transition_pallas.1} parent=31 // pred_check
        %p430 = pneg %p100
      $region34: #{output_transition_pallas.1} parent=31 // pred_check_branch
        %432 = sbr.rel (%p430) target = $region36
      $region35: #{output_transition_pallas.1} parent=31 // pred_region
        %s433 = smul.u32 16, %s14
      $region36: #{output_transition_pallas.1} parent=31 // pred_fallthru
        _
    $region32: #{output_transition_pallas.1} parent=5 // pred_fallthru
      _
    %p434 = scmp.le.s32.totalorder 2, %s9
    // Predicated region
    $region37: #{output_transition_pallas.1} parent=5 // pred_check
      %p435 = pneg %p434
    $region38: #{output_transition_pallas.1} parent=5 // pred_check_branch
      %437 = sbr.rel (%p435) target = $region40
    $region39: #{output_transition_pallas.1} parent=5 // pred_region
      %s438 = ssub.s32 %s9, 2
      // Predicated region
      $region41: #{output_transition_pallas.1} parent=39 // pred_check
        %p439 = pneg %p106
      $region42: #{output_transition_pallas.1} parent=39 // pred_check_branch
        %441 = sbr.rel (%p439) target = $region44
      $region43: #{output_transition_pallas.1} parent=39 // pred_region
        %s442 = smul.u32 16, %s15
        %p443 = scmp.lt.s32.totalorder %s442, 63
        %s444 = scalar_select %p443, %s442, 63
        %s445 = smul.addr %s444, 8
        %s446 = scalar_lea.vmem %s3, %s445
      $region44: #{output_transition_pallas.1} parent=39 // pred_fallthru
        _
    $region40: #{output_transition_pallas.1} parent=5 // pred_fallthru
      _
  $region6: #{output_transition_pallas.1} parent=0 // loop_footer
    %s13 = sadd.s32 1, %s9
  $region7: #{output_transition_pallas.1} parent=0 // loop_footer_branch
    %8 = sbr.rel target = $region3
  $region8: #{output_transition_pallas.1} parent=0 // loop_exit
    _

</llo_original>
